<compile_context>
chip_gen: v6e
topology: v6e:2x2x1
jax: 0.10.0
libtpu: 0.0.40
codegen_flags: <defaults>
</compile_context>

<pallas_src>
import functools
import math

import jax
import jax.numpy as jnp
from jax.experimental import pallas as pl
from jax.experimental.pallas import tpu as pltpu

HIDDEN = 64            # per-network hidden width (PyTorch: nn.Linear(.., 64))
FUSED = 2 * HIDDEN     # 128: fused critic width / padded actor hidden width
OUT = 128              # packed output lanes: [action | q1 | q2 | logp | 0...]
LOG_2PI = math.log(2.0 * math.pi)


def actor_critic_kernel(state_ref, w1_ref, ws_ref, bias_ref, out_ref):
    """One batch-tile of the full ActorCritic.act forward pass.

    state_ref: [TB, S]        f32
    w1_ref:    [S, 256]       bf16  (actor l1 | critic-Q1 l1 state | critic-Q2 l1 state)
    ws_ref:    [5, 128, 128]  bf16  stacked weights (see init_params)
    bias_ref:  [8, 128]       f32   stacked biases (row 5 carries folded logp)
    out_ref:   [TB, 128]      f32   packed (action | q1 | q2 | logp | zeros)
    """
    f32, bf16 = jnp.float32, jnp.bfloat16

    xb = state_ref[...].astype(bf16)
    bias = bias_ref[...]                                           # [8, 128]

    # ---- fused layer-1: actor (lanes 0..127) | critic state-part (128..255)
    z = jnp.dot(xb, w1_ref[...], preferred_element_type=f32)       # [TB, 256]
    ha = jnp.maximum(z[:, :FUSED] + bias[0:1, :], 0.0)             # actor h1
    zc = z[:, FUSED:]                                              # critic h1 (state part)

    # ---- actor layers 2 & 3 (hidden padded to 128 lanes; padding stays 0)
    ha = jnp.maximum(
        jnp.dot(ha.astype(bf16), ws_ref[0], preferred_element_type=f32)
        + bias[1:2, :], 0.0)
    action_full = jnp.tanh(
        jnp.dot(ha.astype(bf16), ws_ref[1], preferred_element_type=f32)
        + bias[2:3, :])                                            # action in lanes 0..A-1
    ab = action_full.astype(bf16)

    # ---- fused critic (Q1 lanes 0..63 | Q2 lanes 64..127)
    hc = jnp.maximum(
        zc + jnp.dot(ab, ws_ref[2], preferred_element_type=f32) + bias[3:4, :], 0.0)
    hc = jnp.maximum(
        jnp.dot(hc.astype(bf16), ws_ref[3], preferred_element_type=f32)
        + bias[4:5, :], 0.0)
    # ws_ref[4] drops q1 -> lane A, q2 -> lane A+1; bias row 5 carries the
    # pre-folded deterministic logp at lane A+2.
    q_slab = (jnp.dot(hc.astype(bf16), ws_ref[4], preferred_element_type=f32)
              + bias[5:6, :])

    # ---- single lane-dense packed store
    out_ref[...] = action_full + q_slab


def init_params(key, state_dim, action_dim, hidden=HIDDEN):
    """PyTorch-style init, re-laid-out into the fused lane-dense kernel params.

    Returns (kernel_params, raw_params); raw_params keeps the exact f32
    PyTorch-layout ([in, out]) weights for the pure-JAX reference.
    """
    assert hidden == HIDDEN
    assert action_dim + 3 <= OUT, "action_dim too large for the 128-lane slab"

    def linear(k, fan_in, fan_out):
        kw, kb = jax.random.split(k)
        bound = 1.0 / float(fan_in) ** 0.5
        w = jax.random.uniform(kw, (fan_in, fan_out), jnp.float32, -bound, bound)
        b = jax.random.uniform(kb, (1, fan_out), jnp.float32, -bound, bound)
        return w, b

    ks = jax.random.split(key, 9)
    S, A, H = state_dim, action_dim, hidden
    sa = S + A

    # ---- raw PyTorch-equivalent parameters (f32, [in, out] layout) ----
    a_w1, a_b1 = linear(ks[0], S, H)
    a_w2, a_b2 = linear(ks[1], H, H)
    a_w3, a_b3 = linear(ks[2], H, A)
    var_p = jnp.zeros((1, A), jnp.float32)          # Var.var = torch.zeros(A)
    c1_w, c1_b = linear(ks[3], sa, H)               # Q1
    c2_w, c2_b = linear(ks[4], H, H)
    c3_w, c3_b = linear(ks[5], H, 1)
    c4_w, c4_b = linear(ks[6], sa, H)               # Q2
    c5_w, c5_b = linear(ks[7], H, H)
    c6_w, c6_b = linear(ks[8], H, 1)

    raw = dict(a_w1=a_w1, a_b1=a_b1, a_w2=a_w2, a_b2=a_b2, a_w3=a_w3, a_b3=a_b3,
               var=var_p,
               c1_w=c1_w, c1_b=c1_b, c2_w=c2_w, c2_b=c2_b, c3_w=c3_w, c3_b=c3_b,
               c4_w=c4_w, c4_b=c4_b, c5_w=c5_w, c5_b=c5_b, c6_w=c6_w, c6_b=c6_b)

    f32, bf16 = jnp.float32, jnp.bfloat16
    z = lambda *shape: jnp.zeros(shape, f32)

    # ---- fused layer-1 state weights: [S, 256] ----
    # cols   0.. 63 : actor l1
    # cols 128..191 : critic Q1 l1 (state part)
    # cols 192..255 : critic Q2 l1 (state part)
    W1 = (z(S, 2 * FUSED)
          .at[:, :H].set(a_w1)
          .at[:, FUSED:FUSED + H].set(c1_w[:S])
          .at[:, FUSED + H:].set(c4_w[:S])).astype(bf16)

    # ---- stacked [5, 128, 128] bf16 weights ----
    WS = jnp.stack([
        z(FUSED, FUSED).at[:H, :H].set(a_w2),                               # 0: actor l2
        z(FUSED, OUT).at[:H, :A].set(a_w3),                                 # 1: actor l3 -> lanes 0..A-1
        (z(OUT, FUSED).at[:A, :H].set(c1_w[S:]).at[:A, H:].set(c4_w[S:])),  # 2: critic l1 (action part)
        (z(FUSED, FUSED).at[:H, :H].set(c2_w).at[H:, H:].set(c5_w)),        # 3: critic l2 (block-diag)
        (z(FUSED, OUT).at[:H, A:A + 1].set(c3_w)
                      .at[H:, A + 1:A + 2].set(c6_w)),                      # 4: critic l3 -> lanes A, A+1
    ]).astype(bf16)

    # ---- stacked [8, 128] f32 biases (exactly one f32 vreg tile) ----
    BIAS = (z(8, OUT)
            .at[0, :H].set(a_b1[0])
            .at[1, :H].set(a_b2[0])
            .at[2, :A].set(a_b3[0])
            .at[3, :H].set(c1_b[0]).at[3, H:2 * H].set(c4_b[0])
            .at[4, :H].set(c2_b[0]).at[4, H:2 * H].set(c5_b[0])
            .at[5, A].set(c3_b[0, 0]).at[5, A + 1].set(c6_b[0, 0]))
    # (row 5, lane A+2 gets the logp constant folded in at call time)

    params = dict(w1=W1, ws=WS, bias=BIAS, var=var_p)
    return params, raw


def _round_up(x, m):
    return (x + m - 1) // m * m


@functools.partial(jax.jit, static_argnames=("action_dim",))
def actor_critic_act(state, params, action_dim):
    B, S = state.shape
    A = action_dim
    assert A + 3 <= OUT

    # Batch-independent log_prob (deterministic => action == mean => the
    # Mahalanobis term is identically 0).  Var.get_var() with (min,max)=(-5,2):
    # sigmoid(v)*3.5 - 1.5.  Folded into the critic layer-3 bias at lane A+2.
    var = jax.nn.sigmoid(params["var"]) * 3.5 + (-1.5)
    logp_const = -0.5 * (jnp.sum(jnp.log(var)) + A * LOG_2PI)
    bias = params["bias"].at[5, A + 2].add(logp_const)

    # Row tile: big blocks (the kernel is per-grid-step overhead bound), but
    # keep >= 2 grid steps for B >= 16 so v7x's two TensorCores both get work.
    TB = min(512, _round_up(B, 8))
    if B >= 16:
        TB = min(TB, _round_up((B + 1) // 2, 8))
    Bp = _round_up(B, TB)
    x = state if Bp == B else jnp.pad(state, ((0, Bp - B), (0, 0)))
    grid = (Bp // TB,)

    w1, ws = params["w1"], params["ws"]
    out = pl.pallas_call(
        actor_critic_kernel,
        out_shape=jax.ShapeDtypeStruct((Bp, OUT), jnp.float32),
        grid_spec=pltpu.PrefetchScalarGridSpec(
            num_scalar_prefetch=0,
            grid=grid,
            in_specs=[
                pl.BlockSpec((TB, S), lambda i: (i, 0)),
                # weights/biases: full-array blocks, constant index -> VMEM-resident
                pl.BlockSpec(w1.shape, lambda i: (0, 0)),
                pl.BlockSpec(ws.shape, lambda i: (0, 0, 0)),
                pl.BlockSpec(bias.shape, lambda i: (0, 0)),
            ],
            out_specs=pl.BlockSpec((TB, OUT), lambda i: (i, 0)),
        ),
        compiler_params=pltpu.CompilerParams(
            dimension_semantics=("parallel",),     # megacore batch split on v7x
            vmem_limit_bytes=32 * 1024 * 1024,     # safe on v7x's 64 MiB VMEM
        ),
    )(x, w1, ws, bias)

    # slice the packed slab back apart (tiny XLA slices outside the kernel)
    action = out[:B, :A]
    q1 = out[:B, A:A + 1]
    q2 = out[:B, A + 1:A + 2]
    logp = out[:B, A + 2]                          # MVN.log_prob returns [B]
    return action, logp, q1, q2


def reference_act(state, raw, action_dim):
    """Pure-JAX f32 reference with PyTorch semantics (deterministic=True)."""
    relu = lambda v: jnp.maximum(v, 0.0)
    h = relu(state @ raw["a_w1"] + raw["a_b1"])
    h = relu(h @ raw["a_w2"] + raw["a_b2"])
    mean = jnp.tanh(h @ raw["a_w3"] + raw["a_b3"])
    action = mean
    var = jax.nn.sigmoid(raw["var"]) * 3.5 + (-1.5)
    diff = action - mean
    maha = jnp.sum(diff * diff / var, axis=-1)
    logp = -0.5 * (maha + jnp.sum(jnp.log(var)) + action_dim * LOG_2PI)
    xa = jnp.concatenate([state, action], axis=-1)
    h1 = relu(xa @ raw["c1_w"] + raw["c1_b"])
    h1 = relu(h1 @ raw["c2_w"] + raw["c2_b"])
    q1 = h1 @ raw["c3_w"] + raw["c3_b"]
    h2 = relu(xa @ raw["c4_w"] + raw["c4_b"])
    h2 = relu(h2 @ raw["c5_w"] + raw["c5_b"])
    q2 = h2 @ raw["c6_w"] + raw["c6_b"]
    return action, logp, q1, q2


if __name__ == "__main__":
    STATE_DIM, ACTION_DIM = 8, 4

    key = jax.random.PRNGKey(0)
    k_param, k_state = jax.random.split(key)
    params, raw = init_params(k_param, STATE_DIM, ACTION_DIM)

    # B=8: clean single full block.  B=13: non-multiple batch -> wrapper pads.
    for B in (8, 13):
        state = jax.random.normal(jax.random.fold_in(k_state, B),
                                  (B, STATE_DIM), jnp.float32)
        action, logp, q1, q2 = actor_critic_act(state, params, ACTION_DIM)
        jax.block_until_ready((action, logp, q1, q2))

        assert action.shape == (B, ACTION_DIM)
        assert logp.shape == (B,)
        assert q1.shape == (B, 1) and q2.shape == (B, 1)

        # correctness vs. f32 PyTorch-layout reference (bf16 MXU -> loose tol)
        ra, rl, rq1, rq2 = reference_act(state, raw, ACTION_DIM)
        assert jnp.allclose(action, ra, atol=5e-2, rtol=5e-2), "action mismatch"
        assert jnp.allclose(logp, rl, atol=5e-2, rtol=5e-2), "log_prob mismatch"
        assert jnp.allclose(q1, rq1, atol=5e-2, rtol=5e-2), "q1 mismatch"
        assert jnp.allclose(q2, rq2, atol=5e-2, rtol=5e-2), "q2 mismatch"

    print("KERNEL_OK")
</pallas_src>

<mosaic_0001>
module attributes {stable_mosaic.version = 11 : i64} {
  func.func @actor_critic_kernel(%arg0: i32, %arg1: memref<8x8xf32, #tpu.memory_space<vmem>>, %arg2: memref<8x256xbf16, #tpu.memory_space<vmem>>, %arg3: memref<5x128x128xbf16, #tpu.memory_space<vmem>>, %arg4: memref<8x128xf32, #tpu.memory_space<vmem>>, %arg5: memref<8x128xf32, #tpu.memory_space<vmem>>) attributes {dimension_semantics = [#tpu.dimension_semantics<parallel>], iteration_bounds = array<i64: 1>, scalar_prefetch = 0 : i64, scratch_operands = 0 : i64, tpu.core_type = #tpu.core_type<tc>, window_params = [{transform_indices = @transform_0, window_bounds = array<i64: 8, 8>}, {pipeline_mode = #tpu.pipeline_mode<synchronous>, transform_indices = @transform_1, window_bounds = array<i64: 8, 256>}, {pipeline_mode = #tpu.pipeline_mode<synchronous>, transform_indices = @transform_2, window_bounds = array<i64: 5, 128, 128>}, {pipeline_mode = #tpu.pipeline_mode<synchronous>, transform_indices = @transform_3, window_bounds = array<i64: 8, 128>}, {transform_indices = @transform_4, window_bounds = array<i64: 8, 128>}]} {
    %c0 = arith.constant 0 : index
    %c0_0 = arith.constant 0 : index
    %0 = vector.load %arg1[%c0, %c0_0] : memref<8x8xf32, #tpu.memory_space<vmem>>, vector<8x8xf32>
    %1 = arith.truncf %0 : vector<8x8xf32> to vector<8x8xbf16>
    %c0_1 = arith.constant 0 : index
    %c0_2 = arith.constant 0 : index
    %2 = vector.load %arg4[%c0_1, %c0_2] : memref<8x128xf32, #tpu.memory_space<vmem>>, vector<8x128xf32>
    %c0_3 = arith.constant 0 : index
    %c0_4 = arith.constant 0 : index
    %3 = vector.load %arg2[%c0_3, %c0_4] : memref<8x256xbf16, #tpu.memory_space<vmem>>, vector<8x256xbf16>
    %cst = arith.constant dense<0.000000e+00> : vector<8x256xf32>
    %4 = tpu.matmul %1, %3, %cst {dimension_numbers = #tpu.dot_dimension_numbers<[1], [0], [0], [1], [0, 0, 1, 1], [], []>} : vector<8x8xbf16>, vector<8x256xbf16>, vector<8x256xf32> -> vector<8x256xf32>
    %5 = vector.extract_strided_slice %4 {offsets = [0, 0], sizes = [8, 128], strides = [1, 1]} : vector<8x256xf32> to vector<8x128xf32>
    %6 = vector.extract_strided_slice %2 {offsets = [0, 0], sizes = [1, 128], strides = [1, 1]} : vector<8x128xf32> to vector<1x128xf32>
    %7 = vector.broadcast %6 : vector<1x128xf32> to vector<8x128xf32>
    %8 = arith.addf %5, %7 : vector<8x128xf32>
    %cst_5 = arith.constant 0.000000e+00 : f32
    %9 = vector.broadcast %cst_5 : f32 to vector<8x128xf32>
    %10 = arith.maximumf %8, %9 : vector<8x128xf32>
    %11 = vector.extract_strided_slice %4 {offsets = [0, 128], sizes = [8, 128], strides = [1, 1]} : vector<8x256xf32> to vector<8x128xf32>
    %12 = arith.truncf %10 : vector<8x128xf32> to vector<8x128xbf16>
    %c0_6 = arith.constant 0 : index
    %c0_7 = arith.constant 0 : index
    %c0_8 = arith.constant 0 : index
    %13 = vector.load %arg3[%c0_6, %c0_7, %c0_8] : memref<5x128x128xbf16, #tpu.memory_space<vmem>>, vector<1x128x128xbf16>
    %14 = vector.shape_cast %13 : vector<1x128x128xbf16> to vector<128x128xbf16>
    %cst_9 = arith.constant dense<0.000000e+00> : vector<8x128xf32>
    %15 = tpu.matmul %12, %14, %cst_9 {dimension_numbers = #tpu.dot_dimension_numbers<[1], [0], [0], [1], [0, 0, 1, 1], [], []>} : vector<8x128xbf16>, vector<128x128xbf16>, vector<8x128xf32> -> vector<8x128xf32>
    %16 = vector.extract_strided_slice %2 {offsets = [1, 0], sizes = [1, 128], strides = [1, 1]} : vector<8x128xf32> to vector<1x128xf32>
    %17 = vector.broadcast %16 : vector<1x128xf32> to vector<8x128xf32>
    %18 = arith.addf %15, %17 : vector<8x128xf32>
    %cst_10 = arith.constant 0.000000e+00 : f32
    %19 = vector.broadcast %cst_10 : f32 to vector<8x128xf32>
    %20 = arith.maximumf %18, %19 : vector<8x128xf32>
    %21 = arith.truncf %20 : vector<8x128xf32> to vector<8x128xbf16>
    %c1 = arith.constant 1 : index
    %c0_11 = arith.constant 0 : index
    %c0_12 = arith.constant 0 : index
    %22 = vector.load %arg3[%c1, %c0_11, %c0_12] : memref<5x128x128xbf16, #tpu.memory_space<vmem>>, vector<1x128x128xbf16>
    %23 = vector.shape_cast %22 : vector<1x128x128xbf16> to vector<128x128xbf16>
    %cst_13 = arith.constant dense<0.000000e+00> : vector<8x128xf32>
    %24 = tpu.matmul %21, %23, %cst_13 {dimension_numbers = #tpu.dot_dimension_numbers<[1], [0], [0], [1], [0, 0, 1, 1], [], []>} : vector<8x128xbf16>, vector<128x128xbf16>, vector<8x128xf32> -> vector<8x128xf32>
    %25 = vector.extract_strided_slice %2 {offsets = [2, 0], sizes = [1, 128], strides = [1, 1]} : vector<8x128xf32> to vector<1x128xf32>
    %26 = vector.broadcast %25 : vector<1x128xf32> to vector<8x128xf32>
    %27 = arith.addf %24, %26 : vector<8x128xf32>
    %28 = math.tanh %27 : vector<8x128xf32>
    %29 = arith.truncf %28 : vector<8x128xf32> to vector<8x128xbf16>
    %c2 = arith.constant 2 : index
    %c0_14 = arith.constant 0 : index
    %c0_15 = arith.constant 0 : index
    %30 = vector.load %arg3[%c2, %c0_14, %c0_15] : memref<5x128x128xbf16, #tpu.memory_space<vmem>>, vector<1x128x128xbf16>
    %31 = vector.shape_cast %30 : vector<1x128x128xbf16> to vector<128x128xbf16>
    %cst_16 = arith.constant dense<0.000000e+00> : vector<8x128xf32>
    %32 = tpu.matmul %29, %31, %cst_16 {dimension_numbers = #tpu.dot_dimension_numbers<[1], [0], [0], [1], [0, 0, 1, 1], [], []>} : vector<8x128xbf16>, vector<128x128xbf16>, vector<8x128xf32> -> vector<8x128xf32>
    %33 = arith.addf %11, %32 : vector<8x128xf32>
    %34 = vector.extract_strided_slice %2 {offsets = [3, 0], sizes = [1, 128], strides = [1, 1]} : vector<8x128xf32> to vector<1x128xf32>
    %35 = vector.broadcast %34 : vector<1x128xf32> to vector<8x128xf32>
    %36 = arith.addf %33, %35 : vector<8x128xf32>
    %cst_17 = arith.constant 0.000000e+00 : f32
    %37 = vector.broadcast %cst_17 : f32 to vector<8x128xf32>
    %38 = arith.maximumf %36, %37 : vector<8x128xf32>
    %39 = arith.truncf %38 : vector<8x128xf32> to vector<8x128xbf16>
    %c3 = arith.constant 3 : index
    %c0_18 = arith.constant 0 : index
    %c0_19 = arith.constant 0 : index
    %40 = vector.load %arg3[%c3, %c0_18, %c0_19] : memref<5x128x128xbf16, #tpu.memory_space<vmem>>, vector<1x128x128xbf16>
    %41 = vector.shape_cast %40 : vector<1x128x128xbf16> to vector<128x128xbf16>
    %cst_20 = arith.constant dense<0.000000e+00> : vector<8x128xf32>
    %42 = tpu.matmul %39, %41, %cst_20 {dimension_numbers = #tpu.dot_dimension_numbers<[1], [0], [0], [1], [0, 0, 1, 1], [], []>} : vector<8x128xbf16>, vector<128x128xbf16>, vector<8x128xf32> -> vector<8x128xf32>
    %43 = vector.extract_strided_slice %2 {offsets = [4, 0], sizes = [1, 128], strides = [1, 1]} : vector<8x128xf32> to vector<1x128xf32>
    %44 = vector.broadcast %43 : vector<1x128xf32> to vector<8x128xf32>
    %45 = arith.addf %42, %44 : vector<8x128xf32>
    %cst_21 = arith.constant 0.000000e+00 : f32
    %46 = vector.broadcast %cst_21 : f32 to vector<8x128xf32>
    %47 = arith.maximumf %45, %46 : vector<8x128xf32>
    %48 = arith.truncf %47 : vector<8x128xf32> to vector<8x128xbf16>
    %c4 = arith.constant 4 : index
    %c0_22 = arith.constant 0 : index
    %c0_23 = arith.constant 0 : index
    %49 = vector.load %arg3[%c4, %c0_22, %c0_23] : memref<5x128x128xbf16, #tpu.memory_space<vmem>>, vector<1x128x128xbf16>
    %50 = vector.shape_cast %49 : vector<1x128x128xbf16> to vector<128x128xbf16>
    %cst_24 = arith.constant dense<0.000000e+00> : vector<8x128xf32>
    %51 = tpu.matmul %48, %50, %cst_24 {dimension_numbers = #tpu.dot_dimension_numbers<[1], [0], [0], [1], [0, 0, 1, 1], [], []>} : vector<8x128xbf16>, vector<128x128xbf16>, vector<8x128xf32> -> vector<8x128xf32>
    %52 = vector.extract_strided_slice %2 {offsets = [5, 0], sizes = [1, 128], strides = [1, 1]} : vector<8x128xf32> to vector<1x128xf32>
    %53 = vector.broadcast %52 : vector<1x128xf32> to vector<8x128xf32>
    %54 = arith.addf %51, %53 : vector<8x128xf32>
    %55 = arith.addf %28, %54 : vector<8x128xf32>
    %c0_25 = arith.constant 0 : index
    %c0_26 = arith.constant 0 : index
    %56 = vector.load %arg5[%c0_25, %c0_26] : memref<8x128xf32, #tpu.memory_space<vmem>>, vector<8x128xf32>
    tpu.vector_store %arg5[%c0_25, %c0_26], %55 {strides = array<i32>} : memref<8x128xf32, #tpu.memory_space<vmem>>, vector<8x128xf32>,
    return
  }
  func.func @transform_0(%arg0: i32) -> (i32, i32) {
    %c0_i32 = arith.constant 0 : i32
    %c0_i32_0 = arith.constant 0 : i32
    return %arg0, %c0_i32 : i32, i32
  }
  func.func @transform_1(%arg0: i32) -> (i32, i32) {
    %c0_i32 = arith.constant 0 : i32
    %c0_i32_0 = arith.constant 0 : i32
    %c0_i32_1 = arith.constant 0 : i32
    return %c0_i32, %c0_i32_0 : i32, i32
  }
  func.func @transform_2(%arg0: i32) -> (i32, i32, i32) {
    %c0_i32 = arith.constant 0 : i32
    %c0_i32_0 = arith.constant 0 : i32
    %c0_i32_1 = arith.constant 0 : i32
    %c0_i32_2 = arith.constant 0 : i32
    return %c0_i32, %c0_i32_0, %c0_i32_1 : i32, i32, i32
  }
  func.func @transform_3(%arg0: i32) -> (i32, i32) {
    %c0_i32 = arith.constant 0 : i32
    %c0_i32_0 = arith.constant 0 : i32
    %c0_i32_1 = arith.constant 0 : i32
    return %c0_i32, %c0_i32_0 : i32, i32
  }
  func.func @transform_4(%arg0: i32) -> (i32, i32) {
    %c0_i32 = arith.constant 0 : i32
    %c0_i32_0 = arith.constant 0 : i32
    return %arg0, %c0_i32 : i32, i32
  }
}

</mosaic_0001>

<llo_original>
// kernel: actor_critic_act.1
$region0: #{actor_critic_act.1}
  #allocation0 [shape = 'u32[]', space=smem, size = 0x4, offset = 0x4, fixed_abs, tag = 'smem constant byte address 0x4 - core index']
  #allocation1 [shape = 'u32[144,128]{1,0:T(1,128)}', space=vmem, size = 0x12000, scoped, tag = 'internal scratch']
  %s0 = inlined_call_operand.vmem [shape: f32[8,8], index: 0, kind: input, shape index: {}]
  %s1 = inlined_call_operand.vmem [shape: bf16[8,256], index: 1, kind: input, shape index: {}]
  %s2 = inlined_call_operand.hbm [shape: bf16[5,128,128], index: 2, kind: input, shape index: {}]
  %s3 = inlined_call_operand.vmem [shape: f32[8,128], index: 3, kind: input, shape index: {}]
  %s4 = inlined_call_operand.vmem [shape: f32[8,128], index: 4, kind: output, shape index: {}]
  %s5 = sld [smem:[#allocation0]]
  $region30: #{actor_critic_act.1} parent=0
    _
  %s7 = ssub.s32 1, %s5
  %s8 = scalar_select 0, %s7, %s5
  $region1: #{actor_critic_act.1} parent=0
    #allocation2 [shape = 'u8[163840]{0}', space=vmem, size = 0x28000, scoped, tag = 'input window, operand 2, single buffered']
    #allocation3 [shape = 's32[1]{0}', space=sflag, size = 0x4, scoped, tag = 'scoped memory for actor_critic_act.1']
    %9 = vsyncpa [#allocation3], 0
    // Predicated region
    $region2: #{actor_critic_act.1} parent=1 // pred_check
      _
    $region3: #{actor_critic_act.1} parent=1 // pred_check_branch
      %11 = sbr.rel (0) target = $region5
    $region4: #{actor_critic_act.1} parent=1 // pred_region
      _
    $region5: #{actor_critic_act.1} parent=1 // pred_fallthru
      _
    // Predicated region
    $region6: #{actor_critic_act.1} parent=1 // pred_check
      _
    $region7: #{actor_critic_act.1} parent=1 // pred_check_branch
      %13 = sbr.rel (0) target = $region9
    $region8: #{actor_critic_act.1} parent=1 // pred_region
      _
    $region9: #{actor_critic_act.1} parent=1 // pred_fallthru
      _
    // Predicated region
    $region10: #{actor_critic_act.1} parent=1 // pred_check
      _
    $region11: #{actor_critic_act.1} parent=1 // pred_check_branch
      %15 = sbr.rel (0) target = $region13
    $region12: #{actor_critic_act.1} parent=1 // pred_region
      %s17 = ssub.s32 5120, 5120
      %18 = vsyncadd [#allocation3], %s17
      %s19 = sshll.u32 [#allocation2], 4
      %s20 = int_to_ptr.vmem [resolvable:$true] %s19
      %25 = dma.hbm_to_vmem [thread:$0]  %s2, 5120, %s20, [#allocation3], 64, 64, 4
    $region13: #{actor_critic_act.1} parent=1 // pred_fallthru
      _
    // Predicated region
    $region14: #{actor_critic_act.1} parent=1 // pred_check
      _
    $region15: #{actor_critic_act.1} parent=1 // pred_check_branch
      %27 = sbr.rel (0) target = $region17
    $region16: #{actor_critic_act.1} parent=1 // pred_region
      _
    $region17: #{actor_critic_act.1} parent=1 // pred_fallthru
      _
    // Predicated region
    $region18: #{actor_critic_act.1} parent=1 // pred_check
      _
    $region19: #{actor_critic_act.1} parent=1 // pred_check_branch
      %29 = sbr.rel (0) target = $region21
    $region20: #{actor_critic_act.1} parent=1 // pred_region
      %30 = dma.done [#allocation3], 5120
    $region21: #{actor_critic_act.1} parent=1 // pred_fallthru
      _
    %v32 = vld [vmem:[%s0] sm:$0xff]
    %v33 = vpack.c.bf16 %v32, %v32
    %v34 = vld [vmem:[%s3] sm:$0xff]
    %v35 = vld [vmem:[%s1] sm:$0xff]
    %v37 = vunpack.c.l.b16 %v35
    %v38 = vunpack.c.h.b16 %v35
    %v39 = vpack.c.b16 %v37, %v37
    %v40 = vpack.c.b16 %v38, %v38
    %vm41 = vcmask 64512
    %v43 = vsel %vm41, %v33, 0
    %vm45 = vcmask 1043456
    %v47 = vsel %vm45, %v39, 0
    %v50 = vsel %vm45, %v40, 0
    %52 = vmatprep.subr.bf16.mxu0 0
    %53 = vmatpush1.bf16.msra.mxu0 0
    %54 = vmatprep.subr.bf16.mxu0 0
    %55 = vmatpush1.bf16.msra.mxu0 0
    %56 = vmatprep.subr.bf16.mxu0 0
    %57 = vmatpush1.bf16.msra.mxu0 0
    %58 = vmatprep.subr.bf16.mxu0 0
    %59 = vmatpush1.bf16.msra.mxu0 0
    %60 = vmatprep.subr.bf16.mxu0 0
    %61 = vmatpush1.bf16.msra.mxu0 0
    %62 = vmatprep.subr.bf16.mxu0 0
    %63 = vmatpush1.bf16.msra.mxu0 0
    %64 = vmatprep.subr.bf16.mxu0 0
    %65 = vmatpush1.bf16.msra.mxu0 0
    %66 = vmatprep.subr.bf16.mxu0 %v50
    %67 = vmatpush1.bf16.msra.mxu0 %v47
    %68 = vmatprep.subr.bf16.mxu0 0
    %69 = vmatpush2.bf16.msra.mxu0 0
    %70 = vmatprep.subr.bf16.mxu0 0
    %71 = vmatpush2.bf16.msra.mxu0 0
    %72 = vmatprep.subr.bf16.mxu0 0
    %73 = vmatpush2.bf16.msra.mxu0 0
    %74 = vmatprep.subr.bf16.mxu0 0
    %75 = vmatpush2.bf16.msra.mxu0 0
    %76 = vmatprep.subr.bf16.mxu0 0
    %77 = vmatpush2.bf16.msra.mxu0 0
    %78 = vmatprep.subr.bf16.mxu0 0
    %79 = vmatpush2.bf16.msra.mxu0 0
    %80 = vmatprep.subr.bf16.mxu0 0
    %81 = vmatpush2.bf16.msra.mxu0 0
    %82 = vmatprep.subr.bf16.mxu0 0
    %83 = vmatpush2.bf16.msra.mxu0 0
    %84 = vmatprep.mubr.bf16.mxu0 0
    %85 = vmatmul.mubr.bf16.gmra.mxu0 %v43
    %v86 = vpop.f32.mrf.mxu0
    %v87 = vadd.f32 0.0, %v86
    %v88 = vpop.f32.mrf.mxu0
    %v89 = vadd.f32 0.0, %v88
    %v90 = vpop.f32.mrf.mxu0
    %v91 = vpop.f32.mrf.mxu0
    %92 = vdwg.mxu0
    %v93 = vlaneseq
    %v94 = vshrl.u32 %v93, 7
    %v95 = vsub.s32 0, %v94
    %v96 = vrot.slane %v34, %v95
    %v97 = vadd.f32 %v87, %v96
    %v98 = vmax.f32 %v97, 0.0
    %v99 = vpack.c.bf16 %v98, %v98
    %v100 = vld [vmem:[#allocation2] sm:$0xf]
    %v101 = vld [vmem:[#allocation2 + $0x4] sm:$0xf]
    %v102 = vld [vmem:[#allocation2 + $0x8] sm:$0xf]
    %v103 = vld [vmem:[#allocation2 + $0xc] sm:$0xf]
    %v104 = vld [vmem:[#allocation2 + $0x10] sm:$0xf]
    %v105 = vld [vmem:[#allocation2 + $0x14] sm:$0xf]
    %v106 = vld [vmem:[#allocation2 + $0x18] sm:$0xf]
    %v107 = vld [vmem:[#allocation2 + $0x1c] sm:$0xf]
    %v108 = vld [vmem:[#allocation2 + $0x20] sm:$0xf]
    %v109 = vld [vmem:[#allocation2 + $0x24] sm:$0xf]
    %v110 = vld [vmem:[#allocation2 + $0x28] sm:$0xf]
    %v111 = vld [vmem:[#allocation2 + $0x2c] sm:$0xf]
    %v112 = vld [vmem:[#allocation2 + $0x30] sm:$0xf]
    %v113 = vld [vmem:[#allocation2 + $0x34] sm:$0xf]
    %v114 = vld [vmem:[#allocation2 + $0x38] sm:$0xf]
    %v115 = vld [vmem:[#allocation2 + $0x3c] sm:$0xf]
    %v116 = vlaneseq
    %v117 = vshrl.u32 %v116, 7
    %v118 = vsub.s32 1, %v117
    %v119 = vrot.slane %v34, %v118
    %v136 = vunpack.c.l.b16 %v100
    %v137 = vunpack.c.l.b16 %v101
    %v138 = vunpack.c.l.b16 %v102
    %v139 = vunpack.c.l.b16 %v103
    %v140 = vunpack.c.l.b16 %v104
    %v141 = vunpack.c.l.b16 %v105
    %v142 = vunpack.c.l.b16 %v106
    %v143 = vunpack.c.l.b16 %v107
    %v144 = vunpack.c.l.b16 %v108
    %v145 = vunpack.c.l.b16 %v109
    %v146 = vunpack.c.l.b16 %v110
    %v147 = vunpack.c.l.b16 %v111
    %v148 = vunpack.c.l.b16 %v112
    %v149 = vunpack.c.l.b16 %v113
    %v150 = vunpack.c.l.b16 %v114
    %v151 = vunpack.c.l.b16 %v115
    %v152 = vpack.c.b16 %v137, %v136
    %v153 = vpack.c.b16 %v139, %v138
    %v154 = vpack.c.b16 %v141, %v140
    %v155 = vpack.c.b16 %v143, %v142
    %v156 = vpack.c.b16 %v145, %v144
    %v157 = vpack.c.b16 %v147, %v146
    %v158 = vpack.c.b16 %v149, %v148
    %v159 = vpack.c.b16 %v151, %v150
    %168 = vmatprep.subr.bf16.mxu0 0
    %169 = vmatpush1.bf16.msra.mxu0 %v159
    %170 = vmatprep.subr.bf16.mxu0 0
    %171 = vmatpush1.bf16.msra.mxu0 %v158
    %172 = vmatprep.subr.bf16.mxu0 0
    %173 = vmatpush1.bf16.msra.mxu0 %v157
    %174 = vmatprep.subr.bf16.mxu0 0
    %175 = vmatpush1.bf16.msra.mxu0 %v156
    %176 = vmatprep.subr.bf16.mxu0 0
    %177 = vmatpush1.bf16.msra.mxu0 %v155
    %178 = vmatprep.subr.bf16.mxu0 0
    %179 = vmatpush1.bf16.msra.mxu0 %v154
    %180 = vmatprep.subr.bf16.mxu0 0
    %181 = vmatpush1.bf16.msra.mxu0 %v153
    %182 = vmatprep.subr.bf16.mxu0 0
    %183 = vmatpush1.bf16.msra.mxu0 %v152
    %184 = vmatprep.subr.bf16.mxu0 0
    %185 = vmatpush2.bf16.msra.mxu0 0
    %186 = vmatprep.subr.bf16.mxu0 0
    %187 = vmatpush2.bf16.msra.mxu0 0
    %188 = vmatprep.subr.bf16.mxu0 0
    %189 = vmatpush2.bf16.msra.mxu0 0
    %190 = vmatprep.subr.bf16.mxu0 0
    %191 = vmatpush2.bf16.msra.mxu0 0
    %192 = vmatprep.subr.bf16.mxu0 0
    %193 = vmatpush2.bf16.msra.mxu0 0
    %194 = vmatprep.subr.bf16.mxu0 0
    %195 = vmatpush2.bf16.msra.mxu0 0
    %196 = vmatprep.subr.bf16.mxu0 0
    %197 = vmatpush2.bf16.msra.mxu0 0
    %198 = vmatprep.subr.bf16.mxu0 0
    %199 = vmatpush2.bf16.msra.mxu0 0
    %200 = vmatprep.mubr.bf16.mxu0 0
    %201 = vmatmul.mubr.bf16.gmra.mxu0 %v99
    %v202 = vpop.f32.mrf.mxu0
    %v203 = vadd.f32 %v119, %v202
    %v204 = vpop.f32.mrf.mxu0
    %v205 = vpop.f32.mrf.mxu0
    %v206 = vpop.f32.mrf.mxu0
    %207 = vdwg.mxu0
    %v208 = vmax.f32 %v203, 0.0
    %v209 = vpack.c.bf16 %v208, %v208
    %s210 = scalar_lea.vmem [#allocation2], 64
    %v211 = vld [vmem:[%s210] sm:$0xf]
    %v212 = vld [vmem:[%s210 + $0x4] sm:$0xf]
    %v213 = vld [vmem:[%s210 + $0x8] sm:$0xf]
    %v214 = vld [vmem:[%s210 + $0xc] sm:$0xf]
    %v215 = vld [vmem:[%s210 + $0x10] sm:$0xf]
    %v216 = vld [vmem:[%s210 + $0x14] sm:$0xf]
    %v217 = vld [vmem:[%s210 + $0x18] sm:$0xf]
    %v218 = vld [vmem:[%s210 + $0x1c] sm:$0xf]
    %v219 = vld [vmem:[%s210 + $0x20] sm:$0xf]
    %v220 = vld [vmem:[%s210 + $0x24] sm:$0xf]
    %v221 = vld [vmem:[%s210 + $0x28] sm:$0xf]
    %v222 = vld [vmem:[%s210 + $0x2c] sm:$0xf]
    %v223 = vld [vmem:[%s210 + $0x30] sm:$0xf]
    %v224 = vld [vmem:[%s210 + $0x34] sm:$0xf]
    %v225 = vld [vmem:[%s210 + $0x38] sm:$0xf]
    %v226 = vld [vmem:[%s210 + $0x3c] sm:$0xf]
    %v227 = vlaneseq
    %v228 = vshrl.u32 %v227, 7
    %v229 = vsub.s32 2, %v228
    %v230 = vrot.slane %v34, %v229
    %v247 = vunpack.c.l.b16 %v211
    %v248 = vunpack.c.l.b16 %v212
    %v249 = vunpack.c.l.b16 %v213
    %v250 = vunpack.c.l.b16 %v214
    %v251 = vunpack.c.l.b16 %v215
    %v252 = vunpack.c.l.b16 %v216
    %v253 = vunpack.c.l.b16 %v217
    %v254 = vunpack.c.l.b16 %v218
    %v255 = vunpack.c.l.b16 %v219
    %v256 = vunpack.c.l.b16 %v220
    %v257 = vunpack.c.l.b16 %v221
    %v258 = vunpack.c.l.b16 %v222
    %v259 = vunpack.c.l.b16 %v223
    %v260 = vunpack.c.l.b16 %v224
    %v261 = vunpack.c.l.b16 %v225
    %v262 = vunpack.c.l.b16 %v226
    %v263 = vpack.c.b16 %v248, %v247
    %v264 = vpack.c.b16 %v250, %v249
    %v265 = vpack.c.b16 %v252, %v251
    %v266 = vpack.c.b16 %v254, %v253
    %v267 = vpack.c.b16 %v256, %v255
    %v268 = vpack.c.b16 %v258, %v257
    %v269 = vpack.c.b16 %v260, %v259
    %v270 = vpack.c.b16 %v262, %v261
    %279 = vmatprep.subr.bf16.mxu0 0
    %280 = vmatpush1.bf16.msra.mxu0 %v270
    %281 = vmatprep.subr.bf16.mxu0 0
    %282 = vmatpush1.bf16.msra.mxu0 %v269
    %283 = vmatprep.subr.bf16.mxu0 0
    %284 = vmatpush1.bf16.msra.mxu0 %v268
    %285 = vmatprep.subr.bf16.mxu0 0
    %286 = vmatpush1.bf16.msra.mxu0 %v267
    %287 = vmatprep.subr.bf16.mxu0 0
    %288 = vmatpush1.bf16.msra.mxu0 %v266
    %289 = vmatprep.subr.bf16.mxu0 0
    %290 = vmatpush1.bf16.msra.mxu0 %v265
    %291 = vmatprep.subr.bf16.mxu0 0
    %292 = vmatpush1.bf16.msra.mxu0 %v264
    %293 = vmatprep.subr.bf16.mxu0 0
    %294 = vmatpush1.bf16.msra.mxu0 %v263
    %295 = vmatprep.subr.bf16.mxu0 0
    %296 = vmatpush2.bf16.msra.mxu0 0
    %297 = vmatprep.subr.bf16.mxu0 0
    %298 = vmatpush2.bf16.msra.mxu0 0
    %299 = vmatprep.subr.bf16.mxu0 0
    %300 = vmatpush2.bf16.msra.mxu0 0
    %301 = vmatprep.subr.bf16.mxu0 0
    %302 = vmatpush2.bf16.msra.mxu0 0
    %303 = vmatprep.subr.bf16.mxu0 0
    %304 = vmatpush2.bf16.msra.mxu0 0
    %305 = vmatprep.subr.bf16.mxu0 0
    %306 = vmatpush2.bf16.msra.mxu0 0
    %307 = vmatprep.subr.bf16.mxu0 0
    %308 = vmatpush2.bf16.msra.mxu0 0
    %309 = vmatprep.subr.bf16.mxu0 0
    %310 = vmatpush2.bf16.msra.mxu0 0
    %311 = vmatprep.mubr.bf16.mxu0 0
    %312 = vmatmul.mubr.bf16.gmra.mxu0 %v209
    %v313 = vpop.f32.mrf.mxu0
    %v314 = vadd.f32 %v230, %v313
    %v315 = vpop.f32.mrf.mxu0
    %v316 = vpop.f32.mrf.mxu0
    %v317 = vpop.f32.mrf.mxu0
    %318 = vdwg.mxu0
    %v319 = vtanh.pop %v314
    %v320 = vpack.c.bf16 %v319, %v319
    %s321 = scalar_lea.vmem [#allocation2], 128
    %v322 = vld [vmem:[%s321] sm:$0xf]
    %v323 = vld [vmem:[%s321 + $0x4] sm:$0xf]
    %v324 = vld [vmem:[%s321 + $0x8] sm:$0xf]
    %v325 = vld [vmem:[%s321 + $0xc] sm:$0xf]
    %v326 = vld [vmem:[%s321 + $0x10] sm:$0xf]
    %v327 = vld [vmem:[%s321 + $0x14] sm:$0xf]
    %v328 = vld [vmem:[%s321 + $0x18] sm:$0xf]
    %v329 = vld [vmem:[%s321 + $0x1c] sm:$0xf]
    %v330 = vld [vmem:[%s321 + $0x20] sm:$0xf]
    %v331 = vld [vmem:[%s321 + $0x24] sm:$0xf]
    %v332 = vld [vmem:[%s321 + $0x28] sm:$0xf]
    %v333 = vld [vmem:[%s321 + $0x2c] sm:$0xf]
    %v334 = vld [vmem:[%s321 + $0x30] sm:$0xf]
    %v335 = vld [vmem:[%s321 + $0x34] sm:$0xf]
    %v336 = vld [vmem:[%s321 + $0x38] sm:$0xf]
    %v337 = vld [vmem:[%s321 + $0x3c] sm:$0xf]
    %v354 = vunpack.c.l.b16 %v322
    %v355 = vunpack.c.l.b16 %v323
    %v356 = vunpack.c.l.b16 %v324
    %v357 = vunpack.c.l.b16 %v325
    %v358 = vunpack.c.l.b16 %v326
    %v359 = vunpack.c.l.b16 %v327
    %v360 = vunpack.c.l.b16 %v328
    %v361 = vunpack.c.l.b16 %v329
    %v362 = vunpack.c.l.b16 %v330
    %v363 = vunpack.c.l.b16 %v331
    %v364 = vunpack.c.l.b16 %v332
    %v365 = vunpack.c.l.b16 %v333
    %v366 = vunpack.c.l.b16 %v334
    %v367 = vunpack.c.l.b16 %v335
    %v368 = vunpack.c.l.b16 %v336
    %v369 = vunpack.c.l.b16 %v337
    %v370 = vpack.c.b16 %v355, %v354
    %v371 = vpack.c.b16 %v357, %v356
    %v372 = vpack.c.b16 %v359, %v358
    %v373 = vpack.c.b16 %v361, %v360
    %v374 = vpack.c.b16 %v363, %v362
    %v375 = vpack.c.b16 %v365, %v364
    %v376 = vpack.c.b16 %v367, %v366
    %v377 = vpack.c.b16 %v369, %v368
    %386 = vmatprep.subr.bf16.mxu0 0
    %387 = vmatpush1.bf16.msra.mxu0 %v377
    %388 = vmatprep.subr.bf16.mxu0 0
    %389 = vmatpush1.bf16.msra.mxu0 %v376
    %390 = vmatprep.subr.bf16.mxu0 0
    %391 = vmatpush1.bf16.msra.mxu0 %v375
    %392 = vmatprep.subr.bf16.mxu0 0
    %393 = vmatpush1.bf16.msra.mxu0 %v374
    %394 = vmatprep.subr.bf16.mxu0 0
    %395 = vmatpush1.bf16.msra.mxu0 %v373
    %396 = vmatprep.subr.bf16.mxu0 0
    %397 = vmatpush1.bf16.msra.mxu0 %v372
    %398 = vmatprep.subr.bf16.mxu0 0
    %399 = vmatpush1.bf16.msra.mxu0 %v371
    %400 = vmatprep.subr.bf16.mxu0 0
    %401 = vmatpush1.bf16.msra.mxu0 %v370
    %402 = vmatprep.subr.bf16.mxu0 0
    %403 = vmatpush2.bf16.msra.mxu0 0
    %404 = vmatprep.subr.bf16.mxu0 0
    %405 = vmatpush2.bf16.msra.mxu0 0
    %406 = vmatprep.subr.bf16.mxu0 0
    %407 = vmatpush2.bf16.msra.mxu0 0
    %408 = vmatprep.subr.bf16.mxu0 0
    %409 = vmatpush2.bf16.msra.mxu0 0
    %410 = vmatprep.subr.bf16.mxu0 0
    %411 = vmatpush2.bf16.msra.mxu0 0
    %412 = vmatprep.subr.bf16.mxu0 0
    %413 = vmatpush2.bf16.msra.mxu0 0
    %414 = vmatprep.subr.bf16.mxu0 0
    %415 = vmatpush2.bf16.msra.mxu0 0
    %416 = vmatprep.subr.bf16.mxu0 0
    %417 = vmatpush2.bf16.msra.mxu0 0
    %418 = vmatprep.mubr.bf16.mxu0 0
    %419 = vmatmul.mubr.bf16.gmra.mxu0 %v320
    %v420 = vpop.f32.mrf.mxu0
    %v421 = vadd.f32 0.0, %v420
    %v422 = vpop.f32.mrf.mxu0
    %v423 = vpop.f32.mrf.mxu0
    %v424 = vpop.f32.mrf.mxu0
    %425 = vdwg.mxu0
    %v426 = vadd.f32 %v89, %v421
    %v427 = vlaneseq
    %v428 = vshrl.u32 %v427, 7
    %v429 = vsub.s32 3, %v428
    %v430 = vrot.slane %v34, %v429
    %v431 = vadd.f32 %v426, %v430
    %v432 = vmax.f32 %v431, 0.0
    %v433 = vpack.c.bf16 %v432, %v432
    %s434 = scalar_lea.vmem [#allocation2], 192
    %v435 = vld [vmem:[%s434] sm:$0xf]
    %v436 = vld [vmem:[%s434 + $0x4] sm:$0xf]
    %v437 = vld [vmem:[%s434 + $0x8] sm:$0xf]
    %v438 = vld [vmem:[%s434 + $0xc] sm:$0xf]
    %v439 = vld [vmem:[%s434 + $0x10] sm:$0xf]
    %v440 = vld [vmem:[%s434 + $0x14] sm:$0xf]
    %v441 = vld [vmem:[%s434 + $0x18] sm:$0xf]
    %v442 = vld [vmem:[%s434 + $0x1c] sm:$0xf]
    %v443 = vld [vmem:[%s434 + $0x20] sm:$0xf]
    %v444 = vld [vmem:[%s434 + $0x24] sm:$0xf]
    %v445 = vld [vmem:[%s434 + $0x28] sm:$0xf]
    %v446 = vld [vmem:[%s434 + $0x2c] sm:$0xf]
    %v447 = vld [vmem:[%s434 + $0x30] sm:$0xf]
    %v448 = vld [vmem:[%s434 + $0x34] sm:$0xf]
    %v449 = vld [vmem:[%s434 + $0x38] sm:$0xf]
    %v450 = vld [vmem:[%s434 + $0x3c] sm:$0xf]
    %v451 = vlaneseq
    %v452 = vshrl.u32 %v451, 7
    %v453 = vsub.s32 4, %v452
    %v454 = vrot.slane %v34, %v453
    %v471 = vunpack.c.l.b16 %v435
    %v472 = vunpack.c.l.b16 %v436
    %v473 = vunpack.c.l.b16 %v437
    %v474 = vunpack.c.l.b16 %v438
    %v475 = vunpack.c.l.b16 %v439
    %v476 = vunpack.c.l.b16 %v440
    %v477 = vunpack.c.l.b16 %v441
    %v478 = vunpack.c.l.b16 %v442
    %v479 = vunpack.c.l.b16 %v443
    %v480 = vunpack.c.l.b16 %v444
    %v481 = vunpack.c.l.b16 %v445
    %v482 = vunpack.c.l.b16 %v446
    %v483 = vunpack.c.l.b16 %v447
    %v484 = vunpack.c.l.b16 %v448
    %v485 = vunpack.c.l.b16 %v449
    %v486 = vunpack.c.l.b16 %v450
    %v487 = vpack.c.b16 %v472, %v471
    %v488 = vpack.c.b16 %v474, %v473
    %v489 = vpack.c.b16 %v476, %v475
    %v490 = vpack.c.b16 %v478, %v477
    %v491 = vpack.c.b16 %v480, %v479
    %v492 = vpack.c.b16 %v482, %v481
    %v493 = vpack.c.b16 %v484, %v483
    %v494 = vpack.c.b16 %v486, %v485
    %503 = vmatprep.subr.bf16.mxu0 0
    %504 = vmatpush1.bf16.msra.mxu0 %v494
    %505 = vmatprep.subr.bf16.mxu0 0
    %506 = vmatpush1.bf16.msra.mxu0 %v493
    %507 = vmatprep.subr.bf16.mxu0 0
    %508 = vmatpush1.bf16.msra.mxu0 %v492
    %509 = vmatprep.subr.bf16.mxu0 0
    %510 = vmatpush1.bf16.msra.mxu0 %v491
    %511 = vmatprep.subr.bf16.mxu0 0
    %512 = vmatpush1.bf16.msra.mxu0 %v490
    %513 = vmatprep.subr.bf16.mxu0 0
    %514 = vmatpush1.bf16.msra.mxu0 %v489
    %515 = vmatprep.subr.bf16.mxu0 0
    %516 = vmatpush1.bf16.msra.mxu0 %v488
    %517 = vmatprep.subr.bf16.mxu0 0
    %518 = vmatpush1.bf16.msra.mxu0 %v487
    %519 = vmatprep.subr.bf16.mxu0 0
    %520 = vmatpush2.bf16.msra.mxu0 0
    %521 = vmatprep.subr.bf16.mxu0 0
    %522 = vmatpush2.bf16.msra.mxu0 0
    %523 = vmatprep.subr.bf16.mxu0 0
    %524 = vmatpush2.bf16.msra.mxu0 0
    %525 = vmatprep.subr.bf16.mxu0 0
    %526 = vmatpush2.bf16.msra.mxu0 0
    %527 = vmatprep.subr.bf16.mxu0 0
    %528 = vmatpush2.bf16.msra.mxu0 0
    %529 = vmatprep.subr.bf16.mxu0 0
    %530 = vmatpush2.bf16.msra.mxu0 0
    %531 = vmatprep.subr.bf16.mxu0 0
    %532 = vmatpush2.bf16.msra.mxu0 0
    %533 = vmatprep.subr.bf16.mxu0 0
    %534 = vmatpush2.bf16.msra.mxu0 0
    %535 = vmatprep.mubr.bf16.mxu0 0
    %536 = vmatmul.mubr.bf16.gmra.mxu0 %v433
    %v537 = vpop.f32.mrf.mxu0
    %v538 = vadd.f32 %v454, %v537
    %v539 = vpop.f32.mrf.mxu0
    %v540 = vpop.f32.mrf.mxu0
    %v541 = vpop.f32.mrf.mxu0
    %542 = vdwg.mxu0
    %v543 = vmax.f32 %v538, 0.0
    %v544 = vpack.c.bf16 %v543, %v543
    %s545 = scalar_lea.vmem [#allocation2], 256
    %v546 = vld [vmem:[%s545] sm:$0xf]
    %v547 = vld [vmem:[%s545 + $0x4] sm:$0xf]
    %v548 = vld [vmem:[%s545 + $0x8] sm:$0xf]
    %v549 = vld [vmem:[%s545 + $0xc] sm:$0xf]
    %v550 = vld [vmem:[%s545 + $0x10] sm:$0xf]
    %v551 = vld [vmem:[%s545 + $0x14] sm:$0xf]
    %v552 = vld [vmem:[%s545 + $0x18] sm:$0xf]
    %v553 = vld [vmem:[%s545 + $0x1c] sm:$0xf]
    %v554 = vld [vmem:[%s545 + $0x20] sm:$0xf]
    %v555 = vld [vmem:[%s545 + $0x24] sm:$0xf]
    %v556 = vld [vmem:[%s545 + $0x28] sm:$0xf]
    %v557 = vld [vmem:[%s545 + $0x2c] sm:$0xf]
    %v558 = vld [vmem:[%s545 + $0x30] sm:$0xf]
    %v559 = vld [vmem:[%s545 + $0x34] sm:$0xf]
    %v560 = vld [vmem:[%s545 + $0x38] sm:$0xf]
    %v561 = vld [vmem:[%s545 + $0x3c] sm:$0xf]
    %v562 = vlaneseq
    %v563 = vshrl.u32 %v562, 7
    %v564 = vsub.s32 5, %v563
    %v565 = vrot.slane %v34, %v564
    %v582 = vunpack.c.l.b16 %v546
    %v583 = vunpack.c.l.b16 %v547
    %v584 = vunpack.c.l.b16 %v548
    %v585 = vunpack.c.l.b16 %v549
    %v586 = vunpack.c.l.b16 %v550
    %v587 = vunpack.c.l.b16 %v551
    %v588 = vunpack.c.l.b16 %v552
    %v589 = vunpack.c.l.b16 %v553
    %v590 = vunpack.c.l.b16 %v554
    %v591 = vunpack.c.l.b16 %v555
    %v592 = vunpack.c.l.b16 %v556
    %v593 = vunpack.c.l.b16 %v557
    %v594 = vunpack.c.l.b16 %v558
    %v595 = vunpack.c.l.b16 %v559
    %v596 = vunpack.c.l.b16 %v560
    %v597 = vunpack.c.l.b16 %v561
    %v598 = vpack.c.b16 %v583, %v582
    %v599 = vpack.c.b16 %v585, %v584
    %v600 = vpack.c.b16 %v587, %v586
    %v601 = vpack.c.b16 %v589, %v588
    %v602 = vpack.c.b16 %v591, %v590
    %v603 = vpack.c.b16 %v593, %v592
    %v604 = vpack.c.b16 %v595, %v594
    %v605 = vpack.c.b16 %v597, %v596
    %614 = vmatprep.subr.bf16.mxu0 0
    %615 = vmatpush1.bf16.msra.mxu0 %v605
    %616 = vmatprep.subr.bf16.mxu0 0
    %617 = vmatpush1.bf16.msra.mxu0 %v604
    %618 = vmatprep.subr.bf16.mxu0 0
    %619 = vmatpush1.bf16.msra.mxu0 %v603
    %620 = vmatprep.subr.bf16.mxu0 0
    %621 = vmatpush1.bf16.msra.mxu0 %v602
    %622 = vmatprep.subr.bf16.mxu0 0
    %623 = vmatpush1.bf16.msra.mxu0 %v601
    %624 = vmatprep.subr.bf16.mxu0 0
    %625 = vmatpush1.bf16.msra.mxu0 %v600
    %626 = vmatprep.subr.bf16.mxu0 0
    %627 = vmatpush1.bf16.msra.mxu0 %v599
    %628 = vmatprep.subr.bf16.mxu0 0
    %629 = vmatpush1.bf16.msra.mxu0 %v598
    %630 = vmatprep.subr.bf16.mxu0 0
    %631 = vmatpush2.bf16.msra.mxu0 0
    %632 = vmatprep.subr.bf16.mxu0 0
    %633 = vmatpush2.bf16.msra.mxu0 0
    %634 = vmatprep.subr.bf16.mxu0 0
    %635 = vmatpush2.bf16.msra.mxu0 0
    %636 = vmatprep.subr.bf16.mxu0 0
    %637 = vmatpush2.bf16.msra.mxu0 0
    %638 = vmatprep.subr.bf16.mxu0 0
    %639 = vmatpush2.bf16.msra.mxu0 0
    %640 = vmatprep.subr.bf16.mxu0 0
    %641 = vmatpush2.bf16.msra.mxu0 0
    %642 = vmatprep.subr.bf16.mxu0 0
    %643 = vmatpush2.bf16.msra.mxu0 0
    %644 = vmatprep.subr.bf16.mxu0 0
    %645 = vmatpush2.bf16.msra.mxu0 0
    %646 = vmatprep.mubr.bf16.mxu0 0
    %647 = vmatmul.mubr.bf16.gmra.mxu0 %v544
    %v648 = vpop.f32.mrf.mxu0
    %v649 = vadd.f32 %v565, %v648
    %v650 = vpop.f32.mrf.mxu0
    %v651 = vpop.f32.mrf.mxu0
    %v652 = vpop.f32.mrf.mxu0
    %653 = vdwg.mxu0
    %v654 = vadd.f32 %v319, %v649
    %655 = vst [vmem:[%s4] sm:$0xff] %v654
    // Predicated region
    $region22: #{actor_critic_act.1} parent=1 // pred_check
      _
    $region23: #{actor_critic_act.1} parent=1 // pred_check_branch
      %657 = sbr.rel (0) target = $region25
    $region24: #{actor_critic_act.1} parent=1 // pred_region
      _
    $region25: #{actor_critic_act.1} parent=1 // pred_fallthru
      _
    // Predicated region
    $region26: #{actor_critic_act.1} parent=1 // pred_check
      _
    $region27: #{actor_critic_act.1} parent=1 // pred_check_branch
      %659 = sbr.rel (0) target = $region29
    $region28: #{actor_critic_act.1} parent=1 // pred_region
      _
    $region29: #{actor_critic_act.1} parent=1 // pred_fallthru
      _
    %660 = vsyncpa [#allocation3], 1

</llo_original>
